<compile_context>
chip_gen: v7x
topology: tpu7x:2x2x1
jax: 0.10.0
libtpu: 0.0.40
codegen_flags: <defaults>
</compile_context>

<pallas_src>
import functools

import jax
import jax.numpy as jnp
from jax.experimental import pallas as pl
from jax.experimental.pallas import tpu as pltpu

CHANNELS = 32
PADDED = 128  # lane-dense padded channel count
EPS = 1e-5


# --------------------------- fused layer kernel ----------------------------

def make_layer_kernel(node_types, edge_types, channels, padded):
    """Builds a fused kernel for one hetero layer (all edge types + norms)."""
    dst_types = sorted({et[2] for et in edge_types},
                       key=lambda t: node_types.index(t))
    incoming = {dt: [et for et in edge_types if et[2] == dt] for dt in dst_types}
    node_idx = {nt: i for i, nt in enumerate(node_types)}
    nE, nN, nD = len(edge_types), len(node_types), len(dst_types)

    def kernel(*refs):
        i0 = 0
        adj_refs = refs[i0:i0 + nE]; i0 += nE      # [n_dst, n_src] bf16 (mean-normalized)
        x_refs = refs[i0:i0 + nN]; i0 += nN        # [n_nodes, padded] f32
        w_refs = refs[i0:i0 + nD]; i0 += nD        # [(k+1)*padded, padded] bf16
        b_refs = refs[i0:i0 + nD]; i0 += nD        # [1, padded] f32
        g_refs = refs[i0:i0 + nD]; i0 += nD        # LayerNorm gamma [1, padded]
        bt_refs = refs[i0:i0 + nD]; i0 += nD       # LayerNorm beta  [1, padded]
        out_refs = refs[i0:]                       # per dst type [n_dst, padded] f32

        # Lane mask for the real (unpadded) channels; LayerNorm stats use it.
        lane = jax.lax.broadcasted_iota(jnp.int32, (1, padded), 1)
        mask = (lane < channels).astype(jnp.float32)
        inv_c = 1.0 / float(channels)

        # bf16 copies of activations for the MXU (f32 accumulation).
        x_bf = [x_refs[i][...].astype(jnp.bfloat16) for i in range(nN)]

        for d, dt in enumerate(dst_types):
            # Per incoming edge type: mean aggregation A @ x_src on the MXU.
            parts = []
            for et in incoming[dt]:
                e = edge_types.index(et)
                agg = jnp.dot(adj_refs[e][...], x_bf[node_idx[et[0]]],
                              preferred_element_type=jnp.float32)
                parts.append(agg.astype(jnp.bfloat16))
            parts.append(x_bf[node_idx[dt]])  # root term (lin_r input)

            # Merged projection: sum_e(lin_l_e(agg_e) + lin_r_e(x_dst)) + bias,
            # as one [N_dst, (k+1)*padded] @ [(k+1)*padded, padded] matmul.
            h_in = jnp.concatenate(parts, axis=-1)
            h = jnp.dot(h_in, w_refs[d][...],
                        preferred_element_type=jnp.float32) + b_refs[d][...]

            # Fused LayerNorm(mode='node') + ReLU (f32, padded lanes masked).
            xm = h * mask
            mean = jnp.sum(xm, axis=-1, keepdims=True) * inv_c
            delta = (h - mean) * mask
            var = jnp.sum(delta * delta, axis=-1, keepdims=True) * inv_c
            y = delta * jax.lax.rsqrt(var + EPS)
            y = y * g_refs[d][...] + bt_refs[d][...]
            out_refs[d][...] = jnp.maximum(y, 0.0)

    return kernel, dst_types, incoming


def hetero_layer(kernel, dst_types, adjs, xs, ws, bs, gs, bts, num_nodes,
                 padded):
    """One fused pallas_call: all SAGEConvs + sum + LayerNorm + ReLU."""
    inputs = list(adjs) + list(xs) + list(ws) + list(bs) + list(gs) + list(bts)
    in_specs = [pl.BlockSpec(a.shape, lambda i: (0, 0)) for a in inputs]
    out_shapes = tuple(
        jax.ShapeDtypeStruct((num_nodes[dt], padded), jnp.float32)
        for dt in dst_types)
    out_specs = tuple(pl.BlockSpec(s.shape, lambda i: (0, 0))
                      for s in out_shapes)
    return pl.pallas_call(
        kernel,
        out_shape=out_shapes,
        grid=(1,),  # whole graph fits VMEM at these sizes; tile dst rows when scaling up
        in_specs=in_specs,
        out_specs=out_specs,
        compiler_params=pltpu.CompilerParams(
            dimension_semantics=("arbitrary",)),
    )(*inputs)


# ------------------------------- glue (JAX) -------------------------------

def build_mean_adj(edge_index, n_src, n_dst):
    """Row-normalized dense adjacency implementing scatter-mean aggregation.

    TODO(synk): for large graphs replace the dense O(N^2) adjacency with a
    CSR scalar-prefetch gather formulation (PrefetchScalarGridSpec).
    """
    src, dst = edge_index[0], edge_index[1]
    counts = jnp.zeros((n_dst, n_src), jnp.float32).at[dst, src].add(1.0)
    deg = counts.sum(axis=1, keepdims=True)
    adj = jnp.where(deg > 0, counts / jnp.maximum(deg, 1.0), 0.0)
    return adj.astype(jnp.bfloat16)  # MXU operand


def init_params(key, node_types, edge_types, channels, num_layers):
    params = {"convs": [], "norms": []}
    scale = 1.0 / jnp.sqrt(jnp.float32(channels))
    for _ in range(num_layers):
        conv_p = {}
        for et in edge_types:
            key, k1, k2 = jax.random.split(key, 3)
            conv_p[et] = {
                # torch Linear weight is (out,in); store transpose (in,out).
                "wl_t": jax.random.normal(k1, (channels, channels), jnp.float32) * scale,
                "bl": jnp.zeros((1, channels), jnp.float32),
                "wr_t": jax.random.normal(k2, (channels, channels), jnp.float32) * scale,
            }
        params["convs"].append(conv_p)
        norm_p = {
            nt: {"w": jnp.ones((1, channels), jnp.float32),
                 "b": jnp.zeros((1, channels), jnp.float32)}
            for nt in node_types
        }
        params["norms"].append(norm_p)
    return params


def _pad2(w, rows, cols):
    r, c = w.shape
    return jnp.pad(w, ((0, rows - r), (0, cols - c)))


def pack_layer_params(params, layer, dst_types, incoming, channels, padded):
    """Pack per-edge-type weights into one big (k+1)*C_pad x C_pad matrix per
    destination node type (lin_l blocks stacked, then sum of lin_r)."""
    conv_p = params["convs"][layer]
    norm_p = params["norms"][layer]
    ws, bs, gs, bts = [], [], [], []
    for dt in dst_types:
        blocks = []
        bias = jnp.zeros((1, padded), jnp.float32)
        wr_sum = jnp.zeros((channels, channels), jnp.float32)
        for et in incoming[dt]:
            p = conv_p[et]
            blocks.append(_pad2(p["wl_t"], padded, padded))
            wr_sum = wr_sum + p["wr_t"]
            bias = bias + _pad2(p["bl"], 1, padded)
        blocks.append(_pad2(wr_sum, padded, padded))
        ws.append(jnp.concatenate(blocks, axis=0).astype(jnp.bfloat16))
        bs.append(bias)
        gs.append(_pad2(norm_p[dt]["w"], 1, padded))
        bts.append(_pad2(norm_p[dt]["b"], 1, padded))
    return ws, bs, gs, bts


def rgcn_forward(params, x_dict, adj_dict, node_types, edge_types, num_nodes,
                 channels, padded, num_layers):
    kernel, dst_types, incoming = make_layer_kernel(
        node_types, edge_types, channels, padded)
    adjs = [adj_dict[et] for et in edge_types]
    # Zero-pad features once to the lane-dense width; padded lanes stay 0
    # through every layer (weights/bias/gamma/beta are zero on padded lanes).
    xs = {nt: jnp.pad(x_dict[nt], ((0, 0), (0, padded - channels)))
          for nt in node_types}
    for layer in range(num_layers):
        ws, bs, gs, bts = pack_layer_params(
            params, layer, dst_types, incoming, channels, padded)
        x_in = [xs[nt] for nt in node_types]
        outs = hetero_layer(kernel, dst_types, adjs, x_in, ws, bs, gs, bts,
                            num_nodes, padded)
        # As in torch_geometric HeteroConv, only destination node types survive.
        xs = dict(zip(dst_types, outs))
    return {nt: v[:, :channels] for nt, v in xs.items()}


# --------------------------------- main ------------------------------------

if __name__ == "__main__":
    channels = CHANNELS
    num_layers = 2
    node_types = ["user", "item"]
    edge_types = [("user", "writes", "item"), ("item", "rev_writes", "user")]
    num_nodes = {"user": 64, "item": 48}
    num_edges = 160

    key = jax.random.PRNGKey(0)
    key, ku, ki = jax.random.split(key, 3)
    x_dict = {
        "user": jax.random.normal(ku, (num_nodes["user"], channels), jnp.float32),
        "item": jax.random.normal(ki, (num_nodes["item"], channels), jnp.float32),
    }

    edge_index_dict = {}
    for et in edge_types:
        src_t, _, dst_t = et
        key, ks, kd = jax.random.split(key, 3)
        src = jax.random.randint(ks, (num_edges,), 0, num_nodes[src_t])
        dst = jax.random.randint(kd, (num_edges,), 0, num_nodes[dst_t])
        edge_index_dict[et] = jnp.stack([src, dst])  # PyG convention: [2, E]

    adj_dict = {
        et: build_mean_adj(edge_index_dict[et], num_nodes[et[0]], num_nodes[et[2]])
        for et in edge_types
    }

    key, kp = jax.random.split(key)
    params = init_params(kp, node_types, edge_types, channels, num_layers)

    out = rgcn_forward(params, x_dict, adj_dict, node_types, edge_types,
                       num_nodes, channels, PADDED, num_layers)
    jax.block_until_ready(out)

    assert out["user"].shape == (num_nodes["user"], channels)
    assert out["item"].shape == (num_nodes["item"], channels)
    assert bool(jnp.all(jnp.isfinite(out["user"]))) and bool(jnp.all(jnp.isfinite(out["item"])))
    print("KERNEL_OK")
</pallas_src>

<mosaic_0001>
module attributes {stable_mosaic.version = 11 : i64} {
  func.func @kernel(%arg0: i32, %arg1: memref<48x64xbf16, #tpu.memory_space<vmem>>, %arg2: memref<64x48xbf16, #tpu.memory_space<vmem>>, %arg3: memref<64x128xf32, #tpu.memory_space<vmem>>, %arg4: memref<48x128xf32, #tpu.memory_space<vmem>>, %arg5: memref<256x128xbf16, #tpu.memory_space<vmem>>, %arg6: memref<256x128xbf16, #tpu.memory_space<vmem>>, %arg7: memref<1x128xf32, #tpu.memory_space<vmem>>, %arg8: memref<1x128xf32, #tpu.memory_space<vmem>>, %arg9: memref<1x128xf32, #tpu.memory_space<vmem>>, %arg10: memref<1x128xf32, #tpu.memory_space<vmem>>, %arg11: memref<1x128xf32, #tpu.memory_space<vmem>>, %arg12: memref<1x128xf32, #tpu.memory_space<vmem>>, %arg13: memref<64x128xf32, #tpu.memory_space<vmem>>, %arg14: memref<48x128xf32, #tpu.memory_space<vmem>>) attributes {dimension_semantics = [#tpu.dimension_semantics<arbitrary>], iteration_bounds = array<i64: 1>, scalar_prefetch = 0 : i64, scratch_operands = 0 : i64, tpu.core_type = #tpu.core_type<tc>, window_params = [{pipeline_mode = #tpu.pipeline_mode<synchronous>, transform_indices = @transform_0, window_bounds = array<i64: 48, 64>}, {pipeline_mode = #tpu.pipeline_mode<synchronous>, transform_indices = @transform_1, window_bounds = array<i64: 64, 48>}, {pipeline_mode = #tpu.pipeline_mode<synchronous>, transform_indices = @transform_2, window_bounds = array<i64: 64, 128>}, {pipeline_mode = #tpu.pipeline_mode<synchronous>, transform_indices = @transform_3, window_bounds = array<i64: 48, 128>}, {pipeline_mode = #tpu.pipeline_mode<synchronous>, transform_indices = @transform_4, window_bounds = array<i64: 256, 128>}, {pipeline_mode = #tpu.pipeline_mode<synchronous>, transform_indices = @transform_5, window_bounds = array<i64: 256, 128>}, {pipeline_mode = #tpu.pipeline_mode<synchronous>, transform_indices = @transform_6, window_bounds = array<i64: 1, 128>}, {pipeline_mode = #tpu.pipeline_mode<synchronous>, transform_indices = @transform_7, window_bounds = array<i64: 1, 128>}, {pipeline_mode = #tpu.pipeline_mode<synchronous>, transform_indices = @transform_8, window_bounds = array<i64: 1, 128>}, {pipeline_mode = #tpu.pipeline_mode<synchronous>, transform_indices = @transform_9, window_bounds = array<i64: 1, 128>}, {pipeline_mode = #tpu.pipeline_mode<synchronous>, transform_indices = @transform_10, window_bounds = array<i64: 1, 128>}, {pipeline_mode = #tpu.pipeline_mode<synchronous>, transform_indices = @transform_11, window_bounds = array<i64: 1, 128>}, {pipeline_mode = #tpu.pipeline_mode<synchronous>, transform_indices = @transform_12, window_bounds = array<i64: 64, 128>}, {pipeline_mode = #tpu.pipeline_mode<synchronous>, transform_indices = @transform_13, window_bounds = array<i64: 48, 128>}]} {
    %0 = tpu.iota {dimensions = array<i32: 1>} : vector<1x128xi32>
    %c32_i32 = arith.constant 32 : i32
    %1 = vector.broadcast %c32_i32 : i32 to vector<1x128xi32>
    %2 = arith.cmpi slt, %0, %1 : vector<1x128xi32>
    %3 = arith.extui %2 : vector<1x128xi1> to vector<1x128xi32>
    %4 = arith.sitofp %3 : vector<1x128xi32> to vector<1x128xf32>
    %c0 = arith.constant 0 : index
    %c0_0 = arith.constant 0 : index
    %5 = vector.load %arg3[%c0, %c0_0] : memref<64x128xf32, #tpu.memory_space<vmem>>, vector<64x128xf32>
    %6 = arith.truncf %5 : vector<64x128xf32> to vector<64x128xbf16>
    %c0_1 = arith.constant 0 : index
    %c0_2 = arith.constant 0 : index
    %7 = vector.load %arg4[%c0_1, %c0_2] : memref<48x128xf32, #tpu.memory_space<vmem>>, vector<48x128xf32>
    %8 = arith.truncf %7 : vector<48x128xf32> to vector<48x128xbf16>
    %c0_3 = arith.constant 0 : index
    %c0_4 = arith.constant 0 : index
    %9 = vector.load %arg2[%c0_3, %c0_4] : memref<64x48xbf16, #tpu.memory_space<vmem>>, vector<64x48xbf16>
    %cst = arith.constant dense<0.000000e+00> : vector<64x128xf32>
    %10 = tpu.matmul %9, %8, %cst {dimension_numbers = #tpu.dot_dimension_numbers<[1], [0], [0], [1], [0, 0, 1, 1], [], []>} : vector<64x48xbf16>, vector<48x128xbf16>, vector<64x128xf32> -> vector<64x128xf32>
    %11 = arith.truncf %10 : vector<64x128xf32> to vector<64x128xbf16>
    %12 = tpu.concatenate %11, %6 in 1 : vector<64x128xbf16>, vector<64x128xbf16> -> vector<64x256xbf16>
    %c0_5 = arith.constant 0 : index
    %c0_6 = arith.constant 0 : index
    %13 = vector.load %arg5[%c0_5, %c0_6] : memref<256x128xbf16, #tpu.memory_space<vmem>>, vector<256x128xbf16>
    %cst_7 = arith.constant dense<0.000000e+00> : vector<64x128xf32>
    %14 = tpu.matmul %12, %13, %cst_7 {dimension_numbers = #tpu.dot_dimension_numbers<[1], [0], [0], [1], [0, 0, 1, 1], [], []>} : vector<64x256xbf16>, vector<256x128xbf16>, vector<64x128xf32> -> vector<64x128xf32>
    %c0_8 = arith.constant 0 : index
    %c0_9 = arith.constant 0 : index
    %15 = vector.load %arg7[%c0_8, %c0_9] : memref<1x128xf32, #tpu.memory_space<vmem>>, vector<1x128xf32>
    %16 = vector.broadcast %15 : vector<1x128xf32> to vector<64x128xf32>
    %17 = arith.addf %14, %16 : vector<64x128xf32>
    %18 = vector.broadcast %4 : vector<1x128xf32> to vector<64x128xf32>
    %19 = arith.mulf %17, %18 : vector<64x128xf32>
    %cst_10 = arith.constant dense<0.000000e+00> : vector<64xf32>
    %20 = vector.multi_reduction <add>, %19, %cst_10 [1] : vector<64x128xf32> to vector<64xf32>
    %21 = vector.shape_cast %20 : vector<64xf32> to vector<64x1xf32>
    %cst_11 = arith.constant 3.125000e-02 : f32
    %22 = vector.broadcast %cst_11 : f32 to vector<64x1xf32>
    %23 = arith.mulf %21, %22 : vector<64x1xf32>
    %24 = vector.broadcast %23 : vector<64x1xf32> to vector<64x128xf32>
    %25 = arith.subf %17, %24 : vector<64x128xf32>
    %26 = vector.broadcast %4 : vector<1x128xf32> to vector<64x128xf32>
    %27 = arith.mulf %25, %26 : vector<64x128xf32>
    %28 = arith.mulf %27, %27 : vector<64x128xf32>
    %cst_12 = arith.constant dense<0.000000e+00> : vector<64xf32>
    %29 = vector.multi_reduction <add>, %28, %cst_12 [1] : vector<64x128xf32> to vector<64xf32>
    %30 = vector.shape_cast %29 : vector<64xf32> to vector<64x1xf32>
    %cst_13 = arith.constant 3.125000e-02 : f32
    %31 = vector.broadcast %cst_13 : f32 to vector<64x1xf32>
    %32 = arith.mulf %30, %31 : vector<64x1xf32>
    %cst_14 = arith.constant 9.99999974E-6 : f32
    %33 = vector.broadcast %cst_14 : f32 to vector<64x1xf32>
    %34 = arith.addf %32, %33 : vector<64x1xf32>
    %35 = math.rsqrt %34 : vector<64x1xf32>
    %36 = vector.broadcast %35 : vector<64x1xf32> to vector<64x128xf32>
    %37 = arith.mulf %27, %36 : vector<64x128xf32>
    %c0_15 = arith.constant 0 : index
    %c0_16 = arith.constant 0 : index
    %38 = vector.load %arg9[%c0_15, %c0_16] : memref<1x128xf32, #tpu.memory_space<vmem>>, vector<1x128xf32>
    %39 = vector.broadcast %38 : vector<1x128xf32> to vector<64x128xf32>
    %40 = arith.mulf %37, %39 : vector<64x128xf32>
    %c0_17 = arith.constant 0 : index
    %c0_18 = arith.constant 0 : index
    %41 = vector.load %arg11[%c0_17, %c0_18] : memref<1x128xf32, #tpu.memory_space<vmem>>, vector<1x128xf32>
    %42 = vector.broadcast %41 : vector<1x128xf32> to vector<64x128xf32>
    %43 = arith.addf %40, %42 : vector<64x128xf32>
    %cst_19 = arith.constant 0.000000e+00 : f32
    %44 = vector.broadcast %cst_19 : f32 to vector<64x128xf32>
    %45 = arith.maximumf %43, %44 : vector<64x128xf32>
    %c0_20 = arith.constant 0 : index
    %c0_21 = arith.constant 0 : index
    %46 = vector.load %arg13[%c0_20, %c0_21] : memref<64x128xf32, #tpu.memory_space<vmem>>, vector<64x128xf32>
    tpu.vector_store %arg13[%c0_20, %c0_21], %45 {strides = array<i32>} : memref<64x128xf32, #tpu.memory_space<vmem>>, vector<64x128xf32>,
    %c0_22 = arith.constant 0 : index
    %c0_23 = arith.constant 0 : index
    %47 = vector.load %arg1[%c0_22, %c0_23] : memref<48x64xbf16, #tpu.memory_space<vmem>>, vector<48x64xbf16>
    %cst_24 = arith.constant dense<0.000000e+00> : vector<48x128xf32>
    %48 = tpu.matmul %47, %6, %cst_24 {dimension_numbers = #tpu.dot_dimension_numbers<[1], [0], [0], [1], [0, 0, 1, 1], [], []>} : vector<48x64xbf16>, vector<64x128xbf16>, vector<48x128xf32> -> vector<48x128xf32>
    %49 = arith.truncf %48 : vector<48x128xf32> to vector<48x128xbf16>
    %50 = tpu.concatenate %49, %8 in 1 : vector<48x128xbf16>, vector<48x128xbf16> -> vector<48x256xbf16>
    %c0_25 = arith.constant 0 : index
    %c0_26 = arith.constant 0 : index
    %51 = vector.load %arg6[%c0_25, %c0_26] : memref<256x128xbf16, #tpu.memory_space<vmem>>, vector<256x128xbf16>
    %cst_27 = arith.constant dense<0.000000e+00> : vector<48x128xf32>
    %52 = tpu.matmul %50, %51, %cst_27 {dimension_numbers = #tpu.dot_dimension_numbers<[1], [0], [0], [1], [0, 0, 1, 1], [], []>} : vector<48x256xbf16>, vector<256x128xbf16>, vector<48x128xf32> -> vector<48x128xf32>
    %c0_28 = arith.constant 0 : index
    %c0_29 = arith.constant 0 : index
    %53 = vector.load %arg8[%c0_28, %c0_29] : memref<1x128xf32, #tpu.memory_space<vmem>>, vector<1x128xf32>
    %54 = vector.broadcast %53 : vector<1x128xf32> to vector<48x128xf32>
    %55 = arith.addf %52, %54 : vector<48x128xf32>
    %56 = vector.broadcast %4 : vector<1x128xf32> to vector<48x128xf32>
    %57 = arith.mulf %55, %56 : vector<48x128xf32>
    %cst_30 = arith.constant dense<0.000000e+00> : vector<48xf32>
    %58 = vector.multi_reduction <add>, %57, %cst_30 [1] : vector<48x128xf32> to vector<48xf32>
    %59 = vector.shape_cast %58 : vector<48xf32> to vector<48x1xf32>
    %cst_31 = arith.constant 3.125000e-02 : f32
    %60 = vector.broadcast %cst_31 : f32 to vector<48x1xf32>
    %61 = arith.mulf %59, %60 : vector<48x1xf32>
    %62 = vector.broadcast %61 : vector<48x1xf32> to vector<48x128xf32>
    %63 = arith.subf %55, %62 : vector<48x128xf32>
    %64 = vector.broadcast %4 : vector<1x128xf32> to vector<48x128xf32>
    %65 = arith.mulf %63, %64 : vector<48x128xf32>
    %66 = arith.mulf %65, %65 : vector<48x128xf32>
    %cst_32 = arith.constant dense<0.000000e+00> : vector<48xf32>
    %67 = vector.multi_reduction <add>, %66, %cst_32 [1] : vector<48x128xf32> to vector<48xf32>
    %68 = vector.shape_cast %67 : vector<48xf32> to vector<48x1xf32>
    %cst_33 = arith.constant 3.125000e-02 : f32
    %69 = vector.broadcast %cst_33 : f32 to vector<48x1xf32>
    %70 = arith.mulf %68, %69 : vector<48x1xf32>
    %cst_34 = arith.constant 9.99999974E-6 : f32
    %71 = vector.broadcast %cst_34 : f32 to vector<48x1xf32>
    %72 = arith.addf %70, %71 : vector<48x1xf32>
    %73 = math.rsqrt %72 : vector<48x1xf32>
    %74 = vector.broadcast %73 : vector<48x1xf32> to vector<48x128xf32>
    %75 = arith.mulf %65, %74 : vector<48x128xf32>
    %c0_35 = arith.constant 0 : index
    %c0_36 = arith.constant 0 : index
    %76 = vector.load %arg10[%c0_35, %c0_36] : memref<1x128xf32, #tpu.memory_space<vmem>>, vector<1x128xf32>
    %77 = vector.broadcast %76 : vector<1x128xf32> to vector<48x128xf32>
    %78 = arith.mulf %75, %77 : vector<48x128xf32>
    %c0_37 = arith.constant 0 : index
    %c0_38 = arith.constant 0 : index
    %79 = vector.load %arg12[%c0_37, %c0_38] : memref<1x128xf32, #tpu.memory_space<vmem>>, vector<1x128xf32>
    %80 = vector.broadcast %79 : vector<1x128xf32> to vector<48x128xf32>
    %81 = arith.addf %78, %80 : vector<48x128xf32>
    %cst_39 = arith.constant 0.000000e+00 : f32
    %82 = vector.broadcast %cst_39 : f32 to vector<48x128xf32>
    %83 = arith.maximumf %81, %82 : vector<48x128xf32>
    %c0_40 = arith.constant 0 : index
    %c0_41 = arith.constant 0 : index
    %84 = vector.load %arg14[%c0_40, %c0_41] : memref<48x128xf32, #tpu.memory_space<vmem>>, vector<48x128xf32>
    tpu.vector_store %arg14[%c0_40, %c0_41], %83 {strides = array<i32>} : memref<48x128xf32, #tpu.memory_space<vmem>>, vector<48x128xf32>,
    return
  }
  func.func @transform_0(%arg0: i32) -> (i32, i32) {
    %c0_i32 = arith.constant 0 : i32
    %c0_i32_0 = arith.constant 0 : i32
    %c0_i32_1 = arith.constant 0 : i32
    return %c0_i32, %c0_i32_0 : i32, i32
  }
  func.func @transform_1(%arg0: i32) -> (i32, i32) {
    %c0_i32 = arith.constant 0 : i32
    %c0_i32_0 = arith.constant 0 : i32
    %c0_i32_1 = arith.constant 0 : i32
    return %c0_i32, %c0_i32_0 : i32, i32
  }
  func.func @transform_2(%arg0: i32) -> (i32, i32) {
    %c0_i32 = arith.constant 0 : i32
    %c0_i32_0 = arith.constant 0 : i32
    %c0_i32_1 = arith.constant 0 : i32
    return %c0_i32, %c0_i32_0 : i32, i32
  }
  func.func @transform_3(%arg0: i32) -> (i32, i32) {
    %c0_i32 = arith.constant 0 : i32
    %c0_i32_0 = arith.constant 0 : i32
    %c0_i32_1 = arith.constant 0 : i32
    return %c0_i32, %c0_i32_0 : i32, i32
  }
  func.func @transform_4(%arg0: i32) -> (i32, i32) {
    %c0_i32 = arith.constant 0 : i32
    %c0_i32_0 = arith.constant 0 : i32
    %c0_i32_1 = arith.constant 0 : i32
    return %c0_i32, %c0_i32_0 : i32, i32
  }
  func.func @transform_5(%arg0: i32) -> (i32, i32) {
    %c0_i32 = arith.constant 0 : i32
    %c0_i32_0 = arith.constant 0 : i32
    %c0_i32_1 = arith.constant 0 : i32
    return %c0_i32, %c0_i32_0 : i32, i32
  }
  func.func @transform_6(%arg0: i32) -> (i32, i32) {
    %c0_i32 = arith.constant 0 : i32
    %c0_i32_0 = arith.constant 0 : i32
    %c0_i32_1 = arith.constant 0 : i32
    return %c0_i32, %c0_i32_0 : i32, i32
  }
  func.func @transform_7(%arg0: i32) -> (i32, i32) {
    %c0_i32 = arith.constant 0 : i32
    %c0_i32_0 = arith.constant 0 : i32
    %c0_i32_1 = arith.constant 0 : i32
    return %c0_i32, %c0_i32_0 : i32, i32
  }
  func.func @transform_8(%arg0: i32) -> (i32, i32) {
    %c0_i32 = arith.constant 0 : i32
    %c0_i32_0 = arith.constant 0 : i32
    %c0_i32_1 = arith.constant 0 : i32
    return %c0_i32, %c0_i32_0 : i32, i32
  }
  func.func @transform_9(%arg0: i32) -> (i32, i32) {
    %c0_i32 = arith.constant 0 : i32
    %c0_i32_0 = arith.constant 0 : i32
    %c0_i32_1 = arith.constant 0 : i32
    return %c0_i32, %c0_i32_0 : i32, i32
  }
  func.func @transform_10(%arg0: i32) -> (i32, i32) {
    %c0_i32 = arith.constant 0 : i32
    %c0_i32_0 = arith.constant 0 : i32
    %c0_i32_1 = arith.constant 0 : i32
    return %c0_i32, %c0_i32_0 : i32, i32
  }
  func.func @transform_11(%arg0: i32) -> (i32, i32) {
    %c0_i32 = arith.constant 0 : i32
    %c0_i32_0 = arith.constant 0 : i32
    %c0_i32_1 = arith.constant 0 : i32
    return %c0_i32, %c0_i32_0 : i32, i32
  }
  func.func @transform_12(%arg0: i32) -> (i32, i32) {
    %c0_i32 = arith.constant 0 : i32
    %c0_i32_0 = arith.constant 0 : i32
    %c0_i32_1 = arith.constant 0 : i32
    return %c0_i32, %c0_i32_0 : i32, i32
  }
  func.func @transform_13(%arg0: i32) -> (i32, i32) {
    %c0_i32 = arith.constant 0 : i32
    %c0_i32_0 = arith.constant 0 : i32
    %c0_i32_1 = arith.constant 0 : i32
    return %c0_i32, %c0_i32_0 : i32, i32
  }
}

</mosaic_0001>

<llo_original>
// kernel: tpu_custom_call.1
$region0: #{tpu_custom_call.1}
  #allocation0 [shape = 'u32[]', space=smem, size = 0x4, offset = 0x4, fixed_abs, tag = 'smem constant byte address 0x4 - core index']
  #allocation1 [shape = 'u32[144,128]{1,0:T(1,128)}', space=vmem, size = 0x12000, scoped, tag = 'internal scratch']
  %s0 = inlined_call_operand.hbm [shape: bf16[48,64], index: 0, kind: input, shape index: {}]
  %s1 = inlined_call_operand.vmem [shape: bf16[64,48], index: 1, kind: input, shape index: {}]
  %s2 = inlined_call_operand.hbm [shape: f32[64,128], index: 2, kind: input, shape index: {}]
  %s3 = inlined_call_operand.vmem [shape: f32[48,128], index: 3, kind: input, shape index: {}]
  %s4 = inlined_call_operand.hbm [shape: bf16[256,128], index: 4, kind: input, shape index: {}]
  %s5 = inlined_call_operand.hbm [shape: bf16[256,128], index: 5, kind: input, shape index: {}]
  %s6 = inlined_call_operand.vmem [shape: f32[1,128], index: 6, kind: input, shape index: {}]
  %s7 = inlined_call_operand.vmem [shape: f32[1,128], index: 7, kind: input, shape index: {}]
  %s8 = inlined_call_operand.vmem [shape: f32[1,128], index: 8, kind: input, shape index: {}]
  %s9 = inlined_call_operand.vmem [shape: f32[1,128], index: 9, kind: input, shape index: {}]
  %s10 = inlined_call_operand.vmem [shape: f32[1,128], index: 10, kind: input, shape index: {}]
  %s11 = inlined_call_operand.vmem [shape: f32[1,128], index: 11, kind: input, shape index: {}]
  %s12 = inlined_call_operand.hbm [shape: f32[64,128], index: 12, kind: output, shape index: {0}]
  %s13 = inlined_call_operand.hbm [shape: f32[48,128], index: 13, kind: output, shape index: {1}]
  %14 = xla_tuple %s12, %s13
  %s15 = sld [smem:[#allocation0]]
  $region82: #{tpu_custom_call.1} parent=0
    _
  %s17 = ssub.s32 1, %s15
  %s18 = scalar_select 0, %s17, %s15
  $region1: #{tpu_custom_call.1} parent=0
    #allocation2 [shape = 'u8[12288]{0}', space=vmem, size = 0x3000, scoped, tag = 'input window, operand 0, single buffered']
    #allocation3 [shape = 's32[1]{0}', space=sflag, size = 0x4, scoped, tag = 'scoped memory for tpu_custom_call.1']
    #allocation4 [shape = 's32[1]{0}', space=sflag, size = 0x4, scoped, tag = 'scoped memory for tpu_custom_call.1']
    #allocation5 [shape = 'u8[32768]{0}', space=vmem, size = 0x8000, scoped, tag = 'input window, operand 2, single buffered']
    #allocation6 [shape = 's32[1]{0}', space=sflag, size = 0x4, scoped, tag = 'scoped memory for tpu_custom_call.1']
    #allocation7 [shape = 'u8[65536]{0}', space=vmem, size = 0x10000, scoped, tag = 'input window, operand 4, single buffered']
    #allocation8 [shape = 'u8[65536]{0}', space=vmem, size = 0x10000, scoped, tag = 'input window, operand 5, single buffered']
    #allocation9 [shape = 's32[1]{0}', space=sflag, size = 0x4, scoped, tag = 'scoped memory for tpu_custom_call.1']
    #allocation10 [shape = 'u8[32768]{0}', space=vmem, size = 0x8000, scoped, tag = 'output window, operand 0, single buffered']
    #allocation11 [shape = 'u8[24576]{0}', space=vmem, size = 0x6000, scoped, tag = 'output window, operand 1, single buffered']
    #allocation12 [shape = 's32[1]{0}', space=sflag, size = 0x4, scoped, tag = 'scoped memory for tpu_custom_call.1']
    %19 = vsyncpa [#allocation3], 0
    %20 = vsyncpa [#allocation6], 0
    %21 = vsyncpa [#allocation9], 0
    %22 = vsyncpa [#allocation4], 0
    %23 = vsyncpa [#allocation12], 0
    // Predicated region
    $region2: #{tpu_custom_call.1} parent=1 // pred_check
      _
    $region3: #{tpu_custom_call.1} parent=1 // pred_check_branch
      %25 = sbr.rel (0) target = $region5
    $region4: #{tpu_custom_call.1} parent=1 // pred_region
      %s27 = ssub.s32 384, 384
      %28 = vsyncadd [#allocation3], %s27
      %s29 = sshll.u32 [#allocation2], 4
      %s30 = int_to_ptr.vmem [resolvable:$true] %s29
      %35 = dma.hbm_to_vmem [thread:$0]  %s0, 384, %s30, [#allocation3], 64, 64, 4
    $region5: #{tpu_custom_call.1} parent=1 // pred_fallthru
      _
    // Predicated region
    $region6: #{tpu_custom_call.1} parent=1 // pred_check
      _
    $region7: #{tpu_custom_call.1} parent=1 // pred_check_branch
      %37 = sbr.rel (0) target = $region9
    $region8: #{tpu_custom_call.1} parent=1 // pred_region
      _
    $region9: #{tpu_custom_call.1} parent=1 // pred_fallthru
      _
    // Predicated region
    $region10: #{tpu_custom_call.1} parent=1 // pred_check
      _
    $region11: #{tpu_custom_call.1} parent=1 // pred_check_branch
      %39 = sbr.rel (0) target = $region13
    $region12: #{tpu_custom_call.1} parent=1 // pred_region
      %s41 = ssub.s32 1024, 1024
      %42 = vsyncadd [#allocation6], %s41
      %s43 = sshll.u32 [#allocation5], 4
      %s44 = int_to_ptr.vmem [resolvable:$true] %s43
      %49 = dma.hbm_to_vmem [thread:$0]  %s2, 1024, %s44, [#allocation6], 128, 128, 8
    $region13: #{tpu_custom_call.1} parent=1 // pred_fallthru
      _
    // Predicated region
    $region14: #{tpu_custom_call.1} parent=1 // pred_check
      _
    $region15: #{tpu_custom_call.1} parent=1 // pred_check_branch
      %51 = sbr.rel (0) target = $region17
    $region16: #{tpu_custom_call.1} parent=1 // pred_region
      _
    $region17: #{tpu_custom_call.1} parent=1 // pred_fallthru
      _
    // Predicated region
    $region18: #{tpu_custom_call.1} parent=1 // pred_check
      _
    $region19: #{tpu_custom_call.1} parent=1 // pred_check_branch
      %53 = sbr.rel (0) target = $region21
    $region20: #{tpu_custom_call.1} parent=1 // pred_region
      %s55 = ssub.s32 2048, 2048
      %56 = vsyncadd [#allocation6], %s55
      %s57 = sshll.u32 [#allocation7], 4
      %s58 = int_to_ptr.vmem [resolvable:$true] %s57
      %63 = dma.hbm_to_vmem [thread:$0]  %s4, 2048, %s58, [#allocation6], 64, 64, 4
    $region21: #{tpu_custom_call.1} parent=1 // pred_fallthru
      _
    // Predicated region
    $region22: #{tpu_custom_call.1} parent=1 // pred_check
      _
    $region23: #{tpu_custom_call.1} parent=1 // pred_check_branch
      %65 = sbr.rel (0) target = $region25
    $region24: #{tpu_custom_call.1} parent=1 // pred_region
      %s67 = ssub.s32 2048, 2048
      %68 = vsyncadd [#allocation9], %s67
      %s69 = sshll.u32 [#allocation8], 4
      %s70 = int_to_ptr.vmem [resolvable:$true] %s69
      %75 = dma.hbm_to_vmem [thread:$0]  %s5, 2048, %s70, [#allocation9], 64, 64, 4
    $region25: #{tpu_custom_call.1} parent=1 // pred_fallthru
      _
    // Predicated region
    $region26: #{tpu_custom_call.1} parent=1 // pred_check
      _
    $region27: #{tpu_custom_call.1} parent=1 // pred_check_branch
      %77 = sbr.rel (0) target = $region29
    $region28: #{tpu_custom_call.1} parent=1 // pred_region
      _
    $region29: #{tpu_custom_call.1} parent=1 // pred_fallthru
      _
    // Predicated region
    $region30: #{tpu_custom_call.1} parent=1 // pred_check
      _
    $region31: #{tpu_custom_call.1} parent=1 // pred_check_branch
      %79 = sbr.rel (0) target = $region33
    $region32: #{tpu_custom_call.1} parent=1 // pred_region
      _
    $region33: #{tpu_custom_call.1} parent=1 // pred_fallthru
      _
    // Predicated region
    $region34: #{tpu_custom_call.1} parent=1 // pred_check
      _
    $region35: #{tpu_custom_call.1} parent=1 // pred_check_branch
      %81 = sbr.rel (0) target = $region37
    $region36: #{tpu_custom_call.1} parent=1 // pred_region
      _
    $region37: #{tpu_custom_call.1} parent=1 // pred_fallthru
      _
    // Predicated region
    $region38: #{tpu_custom_call.1} parent=1 // pred_check
      _
    $region39: #{tpu_custom_call.1} parent=1 // pred_check_branch
      %83 = sbr.rel (0) target = $region41
    $region40: #{tpu_custom_call.1} parent=1 // pred_region
      _
    $region41: #{tpu_custom_call.1} parent=1 // pred_fallthru
      _
    // Predicated region
    $region42: #{tpu_custom_call.1} parent=1 // pred_check
      _
    $region43: #{tpu_custom_call.1} parent=1 // pred_check_branch
      %85 = sbr.rel (0) target = $region45
    $region44: #{tpu_custom_call.1} parent=1 // pred_region
      _
    $region45: #{tpu_custom_call.1} parent=1 // pred_fallthru
      _
    // Predicated region
    $region46: #{tpu_custom_call.1} parent=1 // pred_check
      _
    $region47: #{tpu_custom_call.1} parent=1 // pred_check_branch
      %87 = sbr.rel (0) target = $region49
    $region48: #{tpu_custom_call.1} parent=1 // pred_region
      _
    $region49: #{tpu_custom_call.1} parent=1 // pred_fallthru
      _
    // Predicated region
    $region50: #{tpu_custom_call.1} parent=1 // pred_check
      _
    $region51: #{tpu_custom_call.1} parent=1 // pred_check_branch
      %89 = sbr.rel (0) target = $region53
    $region52: #{tpu_custom_call.1} parent=1 // pred_region
      %90 = dma.done [#allocation3], 384
    $region53: #{tpu_custom_call.1} parent=1 // pred_fallthru
      _
    // Predicated region
    $region54: #{tpu_custom_call.1} parent=1 // pred_check
      _
    $region55: #{tpu_custom_call.1} parent=1 // pred_check_branch
      %92 = sbr.rel (0) target = $region57
    $region56: #{tpu_custom_call.1} parent=1 // pred_region
      %93 = dma.done [#allocation6], 1024
    $region57: #{tpu_custom_call.1} parent=1 // pred_fallthru
      _
    // Predicated region
    $region58: #{tpu_custom_call.1} parent=1 // pred_check
      _
    $region59: #{tpu_custom_call.1} parent=1 // pred_check_branch
      %95 = sbr.rel (0) target = $region61
    $region60: #{tpu_custom_call.1} parent=1 // pred_region
      %96 = dma.done [#allocation6], 2048
    $region61: #{tpu_custom_call.1} parent=1 // pred_fallthru
      _
    // Predicated region
    $region62: #{tpu_custom_call.1} parent=1 // pred_check
      _
    $region63: #{tpu_custom_call.1} parent=1 // pred_check_branch
      %98 = sbr.rel (0) target = $region65
    $region64: #{tpu_custom_call.1} parent=1 // pred_region
      %99 = dma.done [#allocation9], 2048
    $region65: #{tpu_custom_call.1} parent=1 // pred_fallthru
      _
    %v101 = vlaneseq
    %v102 = vand.u32 %v101, 127
    %vm103 = vcmp.lt.s32.totalorder %v102, 32
    %v104 = vsel %vm103, 1, 0
    %v105 = vcvt.s32.f32 %v104
    %v106 = vld [vmem:[#allocation5] sm:$0xff]
    %v107 = vld [vmem:[#allocation5 + $0x8] sm:$0xff]
    %v108 = vld [vmem:[#allocation5 + $0x10] sm:$0xff]
    %v109 = vld [vmem:[#allocation5 + $0x18] sm:$0xff]
    %v110 = vld [vmem:[#allocation5 + $0x20] sm:$0xff]
    %v111 = vld [vmem:[#allocation5 + $0x28] sm:$0xff]
    %v112 = vld [vmem:[#allocation5 + $0x30] sm:$0xff]
    %v113 = vld [vmem:[#allocation5 + $0x38] sm:$0xff]
    %v114 = vpack.c.bf16 %v107, %v106
    %v115 = vpack.c.bf16 %v109, %v108
    %v116 = vpack.c.bf16 %v111, %v110
    %v117 = vpack.c.bf16 %v113, %v112
    %v118 = vld [vmem:[%s3] sm:$0xff]
    %v119 = vld [vmem:[%s3 + $0x8] sm:$0xff]
    %v120 = vld [vmem:[%s3 + $0x10] sm:$0xff]
    %v121 = vld [vmem:[%s3 + $0x18] sm:$0xff]
    %v122 = vld [vmem:[%s3 + $0x20] sm:$0xff]
    %v123 = vld [vmem:[%s3 + $0x28] sm:$0xff]
    %v124 = vpack.c.bf16 %v119, %v118
    %v125 = vpack.c.bf16 %v121, %v120
    %v126 = vpack.c.bf16 %v123, %v122
    %v127 = vld [vmem:[%s1] sm:$0xf]
    %v128 = vld [vmem:[%s1 + $0x4] sm:$0xf]
    %v129 = vld [vmem:[%s1 + $0x8] sm:$0xf]
    %v130 = vld [vmem:[%s1 + $0xc] sm:$0xf]
    %v131 = vld [vmem:[%s1 + $0x10] sm:$0xf]
    %v132 = vld [vmem:[%s1 + $0x14] sm:$0xf]
    %v133 = vld [vmem:[%s1 + $0x18] sm:$0xf]
    %v134 = vld [vmem:[%s1 + $0x1c] sm:$0xf]
    %v143 = vunpack.c.l.b16 %v127
    %v144 = vunpack.c.l.b16 %v128
    %v145 = vunpack.c.l.b16 %v129
    %v146 = vunpack.c.l.b16 %v130
    %v147 = vunpack.c.l.b16 %v131
    %v148 = vunpack.c.l.b16 %v132
    %v149 = vunpack.c.l.b16 %v133
    %v150 = vunpack.c.l.b16 %v134
    %v151 = vpack.c.b16 %v144, %v143
    %v152 = vpack.c.b16 %v146, %v145
    %v153 = vpack.c.b16 %v148, %v147
    %v154 = vpack.c.b16 %v150, %v149
    %vm155 = vcmask 392192
    %v157 = vsel %vm155, %v151, 0
    %v160 = vsel %vm155, %v152, 0
    %v163 = vsel %vm155, %v153, 0
    %v166 = vsel %vm155, %v154, 0
    %168 = vmatprep.subr.bf16.mxu0 0
    %169 = vmatpush1.bf16.msra.mxu0 %v124
    %170 = vmatprep.subr.bf16.mxu0 0
    %171 = vmatpush1.bf16.msra.mxu0 %v125
    %172 = vmatprep.subr.bf16.mxu0 0
    %173 = vmatpush1.bf16.msra.mxu0 %v126
    %174 = vmatprep.subr.bf16.mxu0 0
    %175 = vmatpush1.bf16.msra.mxu0 0
    %176 = vmatprep.subr.bf16.mxu0 0
    %177 = vmatpush1.bf16.msra.mxu0 0
    %178 = vmatprep.subr.bf16.mxu0 0
    %179 = vmatpush1.bf16.msra.mxu0 0
    %180 = vmatprep.subr.bf16.mxu0 0
    %181 = vmatpush1.bf16.msra.mxu0 0
    %182 = vmatprep.subr.bf16.mxu0 0
    %183 = vmatpush1.bf16.msra.mxu0 0
    %184 = vmatprep.subr.bf16.mxu0 0
    %185 = vmatpush1.bf16.msra.mxu0 0
    %186 = vmatprep.subr.bf16.mxu0 0
    %187 = vmatpush1.bf16.msra.mxu0 0
    %188 = vmatprep.subr.bf16.mxu0 0
    %189 = vmatpush1.bf16.msra.mxu0 0
    %190 = vmatprep.subr.bf16.mxu0 0
    %191 = vmatpush1.bf16.msra.mxu0 0
    %192 = vmatprep.subr.bf16.mxu0 0
    %193 = vmatpush1.bf16.msra.mxu0 0
    %194 = vmatprep.subr.bf16.mxu0 0
    %195 = vmatpush1.bf16.msra.mxu0 0
    %196 = vmatprep.subr.bf16.mxu0 0
    %197 = vmatpush1.bf16.msra.mxu0 0
    %198 = vmatprep.subr.bf16.mxu0 0
    %199 = vmatpush1.bf16.msra.mxu0 0
    %200 = vmatprep.mubr.bf16.mxu0 0
    %201 = vmatmul.mubr.bf16.gmra.mrb[0].mxu0 %v157
    %v202 = vpop.f32.mrb[0].mxu0
    %v203 = vadd.f32 0.0, %v202
    %v204 = vpop.f32.mrb[0].mxu0
    %v205 = vpop.f32.mrb[0].mxu0
    %v206 = vadd.f32 0.0, %v205
    %v207 = vpop.f32.mrb[0].mxu0
    %208 = vmatprep.mubr.bf16.mxu0 0
    %209 = vmatmul.mubr.bf16.gmra.mrb[0].mxu0 %v160
    %v210 = vpop.f32.mrb[0].mxu0
    %v211 = vadd.f32 0.0, %v210
    %v212 = vpop.f32.mrb[0].mxu0
    %v213 = vpop.f32.mrb[0].mxu0
    %v214 = vadd.f32 0.0, %v213
    %v215 = vpop.f32.mrb[0].mxu0
    %216 = vmatprep.mubr.bf16.mxu0 0
    %217 = vmatmul.mubr.bf16.gmra.mrb[0].mxu0 %v163
    %v218 = vpop.f32.mrb[0].mxu0
    %v219 = vadd.f32 0.0, %v218
    %v220 = vpop.f32.mrb[0].mxu0
    %v221 = vpop.f32.mrb[0].mxu0
    %v222 = vadd.f32 0.0, %v221
    %v223 = vpop.f32.mrb[0].mxu0
    %224 = vmatprep.mubr.bf16.mxu0 0
    %225 = vmatmul.mubr.bf16.gmra.mrb[0].mxu0 %v166
    %v226 = vpop.f32.mrb[0].mxu0
    %v227 = vadd.f32 0.0, %v226
    %v228 = vpop.f32.mrb[0].mxu0
    %v229 = vpop.f32.mrb[0].mxu0
    %v230 = vadd.f32 0.0, %v229
    %v231 = vpop.f32.mrb[0].mxu0
    %232 = vdwg.mxu0
    %v233 = vpack.c.bf16 %v206, %v203
    %v234 = vpack.c.bf16 %v214, %v211
    %v235 = vpack.c.bf16 %v222, %v219
    %v236 = vpack.c.bf16 %v230, %v227
    %v237 = vld [vmem:[#allocation7] sm:$0xf]
    %v238 = vld [vmem:[#allocation7 + $0x4] sm:$0xf]
    %v239 = vld [vmem:[#allocation7 + $0x8] sm:$0xf]
    %v240 = vld [vmem:[#allocation7 + $0xc] sm:$0xf]
    %v241 = vld [vmem:[#allocation7 + $0x10] sm:$0xf]
    %v242 = vld [vmem:[#allocation7 + $0x14] sm:$0xf]
    %v243 = vld [vmem:[#allocation7 + $0x18] sm:$0xf]
    %v244 = vld [vmem:[#allocation7 + $0x1c] sm:$0xf]
    %v245 = vld [vmem:[#allocation7 + $0x20] sm:$0xf]
    %v246 = vld [vmem:[#allocation7 + $0x24] sm:$0xf]
    %v247 = vld [vmem:[#allocation7 + $0x28] sm:$0xf]
    %v248 = vld [vmem:[#allocation7 + $0x2c] sm:$0xf]
    %v249 = vld [vmem:[#allocation7 + $0x30] sm:$0xf]
    %v250 = vld [vmem:[#allocation7 + $0x34] sm:$0xf]
    %v251 = vld [vmem:[#allocation7 + $0x38] sm:$0xf]
    %v252 = vld [vmem:[#allocation7 + $0x3c] sm:$0xf]
    %v253 = vld [vmem:[#allocation7 + $0x40] sm:$0xf]
    %v254 = vld [vmem:[#allocation7 + $0x44] sm:$0xf]
    %v255 = vld [vmem:[#allocation7 + $0x48] sm:$0xf]
    %v256 = vld [vmem:[#allocation7 + $0x4c] sm:$0xf]
    %v257 = vld [vmem:[#allocation7 + $0x50] sm:$0xf]
    %v258 = vld [vmem:[#allocation7 + $0x54] sm:$0xf]
    %v259 = vld [vmem:[#allocation7 + $0x58] sm:$0xf]
    %v260 = vld [vmem:[#allocation7 + $0x5c] sm:$0xf]
    %v261 = vld [vmem:[#allocation7 + $0x60] sm:$0xf]
    %v262 = vld [vmem:[#allocation7 + $0x64] sm:$0xf]
    %v263 = vld [vmem:[#allocation7 + $0x68] sm:$0xf]
    %v264 = vld [vmem:[#allocation7 + $0x6c] sm:$0xf]
    %v265 = vld [vmem:[#allocation7 + $0x70] sm:$0xf]
    %v266 = vld [vmem:[#allocation7 + $0x74] sm:$0xf]
    %v267 = vld [vmem:[#allocation7 + $0x78] sm:$0xf]
    %v268 = vld [vmem:[#allocation7 + $0x7c] sm:$0xf]
    %v269 = vld [vmem:[%s6] sm:$0x1]
    %v271 = vlaneseq
    %v272 = vshrl.u32 %v271, 7
    %v273 = vsub.s32 0, %v272
    %v274 = vrot.slane %v269, %v273
    %v308 = vunpack.c.l.b16 %v237
    %v309 = vunpack.c.l.b16 %v238
    %v310 = vunpack.c.l.b16 %v239
    %v311 = vunpack.c.l.b16 %v240
    %v312 = vunpack.c.l.b16 %v241
    %v313 = vunpack.c.l.b16 %v242
    %v314 = vunpack.c.l.b16 %v243
    %v315 = vunpack.c.l.b16 %v244
    %v316 = vunpack.c.l.b16 %v245
    %v317 = vunpack.c.l.b16 %v246
    %v318 = vunpack.c.l.b16 %v247
    %v319 = vunpack.c.l.b16 %v248
    %v320 = vunpack.c.l.b16 %v249
    %v321 = vunpack.c.l.b16 %v250
    %v322 = vunpack.c.l.b16 %v251
    %v323 = vunpack.c.l.b16 %v252
    %v324 = vunpack.c.l.b16 %v253
    %v325 = vunpack.c.l.b16 %v254
    %v326 = vunpack.c.l.b16 %v255
    %v327 = vunpack.c.l.b16 %v256
    %v328 = vunpack.c.l.b16 %v257
    %v329 = vunpack.c.l.b16 %v258
    %v330 = vunpack.c.l.b16 %v259
    %v331 = vunpack.c.l.b16 %v260
    %v332 = vunpack.c.l.b16 %v261
    %v333 = vunpack.c.l.b16 %v262
    %v334 = vunpack.c.l.b16 %v263
    %v335 = vunpack.c.l.b16 %v264
    %v336 = vunpack.c.l.b16 %v265
    %v337 = vunpack.c.l.b16 %v266
    %v338 = vunpack.c.l.b16 %v267
    %v339 = vunpack.c.l.b16 %v268
    %v340 = vpack.c.b16 %v309, %v308
    %v341 = vpack.c.b16 %v311, %v310
    %v342 = vpack.c.b16 %v313, %v312
    %v343 = vpack.c.b16 %v315, %v314
    %v344 = vpack.c.b16 %v317, %v316
    %v345 = vpack.c.b16 %v319, %v318
    %v346 = vpack.c.b16 %v321, %v320
    %v347 = vpack.c.b16 %v323, %v322
    %v348 = vpack.c.b16 %v325, %v324
    %v349 = vpack.c.b16 %v327, %v326
    %v350 = vpack.c.b16 %v329, %v328
    %v351 = vpack.c.b16 %v331, %v330
    %v352 = vpack.c.b16 %v333, %v332
    %v353 = vpack.c.b16 %v335, %v334
    %v354 = vpack.c.b16 %v337, %v336
    %v355 = vpack.c.b16 %v339, %v338
    %372 = vmatprep.subr.bf16.mxu0 0
    %373 = vmatpush1.bf16.msra.mxu0 %v340
    %374 = vmatprep.subr.bf16.mxu0 0
    %375 = vmatpush1.bf16.msra.mxu0 %v341
    %376 = vmatprep.subr.bf16.mxu0 0
    %377 = vmatpush1.bf16.msra.mxu0 %v342
    %378 = vmatprep.subr.bf16.mxu0 0
    %379 = vmatpush1.bf16.msra.mxu0 %v343
    %380 = vmatprep.subr.bf16.mxu0 0
    %381 = vmatpush1.bf16.msra.mxu0 %v344
    %382 = vmatprep.subr.bf16.mxu0 0
    %383 = vmatpush1.bf16.msra.mxu0 %v345
    %384 = vmatprep.subr.bf16.mxu0 0
    %385 = vmatpush1.bf16.msra.mxu0 %v346
    %386 = vmatprep.subr.bf16.mxu0 0
    %387 = vmatpush1.bf16.msra.mxu0 %v347
    %388 = vmatprep.subr.bf16.mxu0 0
    %389 = vmatpush1.bf16.msra.mxu0 %v348
    %390 = vmatprep.subr.bf16.mxu0 0
    %391 = vmatpush1.bf16.msra.mxu0 %v349
    %392 = vmatprep.subr.bf16.mxu0 0
    %393 = vmatpush1.bf16.msra.mxu0 %v350
    %394 = vmatprep.subr.bf16.mxu0 0
    %395 = vmatpush1.bf16.msra.mxu0 %v351
    %396 = vmatprep.subr.bf16.mxu0 0
    %397 = vmatpush1.bf16.msra.mxu0 %v352
    %398 = vmatprep.subr.bf16.mxu0 0
    %399 = vmatpush1.bf16.msra.mxu0 %v353
    %400 = vmatprep.subr.bf16.mxu0 0
    %401 = vmatpush1.bf16.msra.mxu0 %v354
    %402 = vmatprep.subr.bf16.mxu0 0
    %403 = vmatpush1.bf16.msra.mxu0 %v355
    %404 = vmatprep.mubr.bf16.mxu0 %v114
    %405 = vmatmul.mubr.bf16.gmra.mrb[0].mxu0 %v233
    %v406 = vpop.f32.mrb[0].mxu0
    %v407 = vadd.f32 %v274, %v406
    %v408 = vpop.f32.mrb[0].mxu0
    %v409 = vpop.f32.mrb[0].mxu0
    %v410 = vadd.f32 %v274, %v409
    %v411 = vpop.f32.mrb[0].mxu0
    %412 = vmatprep.mubr.bf16.mxu0 %v115
    %413 = vmatmul.mubr.bf16.gmra.mrb[0].mxu0 %v234
    %v414 = vpop.f32.mrb[0].mxu0
    %v415 = vadd.f32 %v274, %v414
    %v416 = vpop.f32.mrb[0].mxu0
    %v417 = vpop.f32.mrb[0].mxu0
    %v418 = vadd.f32 %v274, %v417
    %v419 = vpop.f32.mrb[0].mxu0
    %420 = vmatprep.mubr.bf16.mxu0 %v116
    %421 = vmatmul.mubr.bf16.gmra.mrb[0].mxu0 %v235
    %v422 = vpop.f32.mrb[0].mxu0
    %v423 = vadd.f32 %v274, %v422
    %v424 = vpop.f32.mrb[0].mxu0
    %v425 = vpop.f32.mrb[0].mxu0
    %v426 = vadd.f32 %v274, %v425
    %v427 = vpop.f32.mrb[0].mxu0
    %428 = vmatprep.mubr.bf16.mxu0 %v117
    %429 = vmatmul.mubr.bf16.gmra.mrb[0].mxu0 %v236
    %v430 = vpop.f32.mrb[0].mxu0
    %v431 = vadd.f32 %v274, %v430
    %v432 = vpop.f32.mrb[0].mxu0
    %v433 = vpop.f32.mrb[0].mxu0
    %v434 = vadd.f32 %v274, %v433
    %v435 = vpop.f32.mrb[0].mxu0
    %436 = vdwg.mxu0
    %v437 = vmul.f32 %v407, %v105
    %v438 = vmul.f32 %v410, %v105
    %v439 = vmul.f32 %v415, %v105
    %v440 = vmul.f32 %v418, %v105
    %v441 = vmul.f32 %v423, %v105
    %v442 = vmul.f32 %v426, %v105
    %v443 = vmul.f32 %v431, %v105
    %v444 = vmul.f32 %v434, %v105
    %445 = vadd.xlane.f32.xlu0 %v437
    %v446 = vpop.xlane.xlu0 %445
    %447 = vadd.xlane.f32.xlu0 %v438
    %v448 = vpop.xlane.xlu0 %447
    %449 = vadd.xlane.f32.xlu0 %v439
    %v450 = vpop.xlane.xlu0 %449
    %451 = vadd.xlane.f32.xlu0 %v440
    %v452 = vpop.xlane.xlu0 %451
    %453 = vadd.xlane.f32.xlu0 %v441
    %v454 = vpop.xlane.xlu0 %453
    %455 = vadd.xlane.f32.xlu0 %v442
    %v456 = vpop.xlane.xlu0 %455
    %457 = vadd.xlane.f32.xlu0 %v443
    %v458 = vpop.xlane.xlu0 %457
    %459 = vadd.xlane.f32.xlu0 %v444
    %v460 = vpop.xlane.xlu0 %459
    %v461 = vmul.f32 %v446, 0.03125
    %v462 = vmul.f32 %v448, 0.03125
    %v463 = vmul.f32 %v450, 0.03125
    %v464 = vmul.f32 %v452, 0.03125
    %v465 = vmul.f32 %v454, 0.03125
    %v466 = vmul.f32 %v456, 0.03125
    %v467 = vmul.f32 %v458, 0.03125
    %v468 = vmul.f32 %v460, 0.03125
    %v469 = vsub.f32 %v407, %v461
    %v470 = vsub.f32 %v410, %v462
    %v471 = vsub.f32 %v415, %v463
    %v472 = vsub.f32 %v418, %v464
    %v473 = vsub.f32 %v423, %v465
    %v474 = vsub.f32 %v426, %v466
    %v475 = vsub.f32 %v431, %v467
    %v476 = vsub.f32 %v434, %v468
    %v477 = vmul.f32 %v469, %v105
    %v478 = vmul.f32 %v470, %v105
    %v479 = vmul.f32 %v471, %v105
    %v480 = vmul.f32 %v472, %v105
    %v481 = vmul.f32 %v473, %v105
    %v482 = vmul.f32 %v474, %v105
    %v483 = vmul.f32 %v475, %v105
    %v484 = vmul.f32 %v476, %v105
    %v485 = vmul.f32 %v477, %v477
    %v486 = vmul.f32 %v478, %v478
    %v487 = vmul.f32 %v479, %v479
    %v488 = vmul.f32 %v480, %v480
    %v489 = vmul.f32 %v481, %v481
    %v490 = vmul.f32 %v482, %v482
    %v491 = vmul.f32 %v483, %v483
    %v492 = vmul.f32 %v484, %v484
    %493 = vadd.xlane.f32.xlu0 %v485
    %v494 = vpop.xlane.xlu0 %493
    %495 = vadd.xlane.f32.xlu0 %v486
    %v496 = vpop.xlane.xlu0 %495
    %497 = vadd.xlane.f32.xlu0 %v487
    %v498 = vpop.xlane.xlu0 %497
    %499 = vadd.xlane.f32.xlu0 %v488
    %v500 = vpop.xlane.xlu0 %499
    %501 = vadd.xlane.f32.xlu0 %v489
    %v502 = vpop.xlane.xlu0 %501
    %503 = vadd.xlane.f32.xlu0 %v490
    %v504 = vpop.xlane.xlu0 %503
    %505 = vadd.xlane.f32.xlu0 %v491
    %v506 = vpop.xlane.xlu0 %505
    %507 = vadd.xlane.f32.xlu0 %v492
    %v508 = vpop.xlane.xlu0 %507
    %v509 = vmul.f32 %v494, 0.03125
    %v510 = vmul.f32 %v496, 0.03125
    %v511 = vmul.f32 %v498, 0.03125
    %v512 = vmul.f32 %v500, 0.03125
    %v513 = vmul.f32 %v502, 0.03125
    %v514 = vmul.f32 %v504, 0.03125
    %v515 = vmul.f32 %v506, 0.03125
    %v516 = vmul.f32 %v508, 0.03125
    %v517 = vadd.f32 %v509, 1e-05
    %v518 = vadd.f32 %v510, 1e-05
    %v519 = vadd.f32 %v511, 1e-05
    %v520 = vadd.f32 %v512, 1e-05
    %v521 = vadd.f32 %v513, 1e-05
    %v522 = vadd.f32 %v514, 1e-05
    %v523 = vadd.f32 %v515, 1e-05
    %v524 = vadd.f32 %v516, 1e-05
    %v525 = vrsqrt.pop %v517
    %v526 = vrsqrt.pop %v518
    %v527 = vrsqrt.pop %v519
    %v528 = vrsqrt.pop %v520
    %v529 = vrsqrt.pop %v521
    %v530 = vrsqrt.pop %v522
    %v531 = vrsqrt.pop %v523
    %v532 = vrsqrt.pop %v524
    %v533 = vmul.f32 %v477, %v525
    %v534 = vmul.f32 %v478, %v526
    %v535 = vmul.f32 %v479, %v527
    %v536 = vmul.f32 %v480, %v528
    %v537 = vmul.f32 %v481, %v529
    %v538 = vmul.f32 %v482, %v530
    %v539 = vmul.f32 %v483, %v531
    %v540 = vmul.f32 %v484, %v532
    %v541 = vld [vmem:[%s8] sm:$0x1]
    %v543 = vlaneseq
    %v544 = vshrl.u32 %v543, 7
    %v545 = vsub.s32 0, %v544
    %v546 = vrot.slane %v541, %v545
    %v548 = vmul.f32 %v533, %v546
    %v549 = vmul.f32 %v534, %v546
    %v550 = vmul.f32 %v535, %v546
    %v551 = vmul.f32 %v536, %v546
    %v552 = vmul.f32 %v537, %v546
    %v553 = vmul.f32 %v538, %v546
    %v554 = vmul.f32 %v539, %v546
    %v555 = vmul.f32 %v540, %v546
    %v556 = vld [vmem:[%s10] sm:$0x1]
    %v558 = vlaneseq
    %v559 = vshrl.u32 %v558, 7
    %v560 = vsub.s32 0, %v559
    %v561 = vrot.slane %v556, %v560
    %v563 = vadd.f32 %v548, %v561
    %v564 = vadd.f32 %v549, %v561
    %v565 = vadd.f32 %v550, %v561
    %v566 = vadd.f32 %v551, %v561
    %v567 = vadd.f32 %v552, %v561
    %v568 = vadd.f32 %v553, %v561
    %v569 = vadd.f32 %v554, %v561
    %v570 = vadd.f32 %v555, %v561
    %v571 = vmax.f32 %v563, 0.0
    %v572 = vmax.f32 %v564, 0.0
    %v573 = vmax.f32 %v565, 0.0
    %v574 = vmax.f32 %v566, 0.0
    %v575 = vmax.f32 %v567, 0.0
    %v576 = vmax.f32 %v568, 0.0
    %v577 = vmax.f32 %v569, 0.0
    %v578 = vmax.f32 %v570, 0.0
    %579 = vst [vmem:[#allocation10] sm:$0xff] %v571
    %580 = vst [vmem:[#allocation10 + $0x8] sm:$0xff] %v572
    %581 = vst [vmem:[#allocation10 + $0x10] sm:$0xff] %v573
    %582 = vst [vmem:[#allocation10 + $0x18] sm:$0xff] %v574
    %583 = vst [vmem:[#allocation10 + $0x20] sm:$0xff] %v575
    %584 = vst [vmem:[#allocation10 + $0x28] sm:$0xff] %v576
    %585 = vst [vmem:[#allocation10 + $0x30] sm:$0xff] %v577
    %586 = vst [vmem:[#allocation10 + $0x38] sm:$0xff] %v578
    %v587 = vld [vmem:[#allocation2] sm:$0xf]
    %v588 = vld [vmem:[#allocation2 + $0x4] sm:$0xf]
    %v589 = vld [vmem:[#allocation2 + $0x8] sm:$0xf]
    %v590 = vld [vmem:[#allocation2 + $0xc] sm:$0xf]
    %v591 = vld [vmem:[#allocation2 + $0x10] sm:$0xf]
    %v592 = vld [vmem:[#allocation2 + $0x14] sm:$0xf]
    %v599 = vunpack.c.l.b16 %v587
    %v600 = vunpack.c.l.b16 %v588
    %v601 = vunpack.c.l.b16 %v589
    %v602 = vunpack.c.l.b16 %v590
    %v603 = vunpack.c.l.b16 %v591
    %v604 = vunpack.c.l.b16 %v592
    %v605 = vpack.c.b16 %v600, %v599
    %v606 = vpack.c.b16 %v602, %v601
    %v607 = vpack.c.b16 %v604, %v603
    %vm608 = vcmask 523264
    %v610 = vsel %vm608, %v605, 0
    %v613 = vsel %vm608, %v606, 0
    %v616 = vsel %vm608, %v607, 0
    %618 = vmatprep.subr.bf16.mxu0 0
    %619 = vmatpush1.bf16.msra.mxu0 %v114
    %620 = vmatprep.subr.bf16.mxu0 0
    %621 = vmatpush1.bf16.msra.mxu0 %v115
    %622 = vmatprep.subr.bf16.mxu0 0
    %623 = vmatpush1.bf16.msra.mxu0 %v116
    %624 = vmatprep.subr.bf16.mxu0 0
    %625 = vmatpush1.bf16.msra.mxu0 %v117
    %626 = vmatprep.subr.bf16.mxu0 0
    %627 = vmatpush1.bf16.msra.mxu0 0
    %628 = vmatprep.subr.bf16.mxu0 0
    %629 = vmatpush1.bf16.msra.mxu0 0
    %630 = vmatprep.subr.bf16.mxu0 0
    %631 = vmatpush1.bf16.msra.mxu0 0
    %632 = vmatprep.subr.bf16.mxu0 0
    %633 = vmatpush1.bf16.msra.mxu0 0
    %634 = vmatprep.subr.bf16.mxu0 0
    %635 = vmatpush1.bf16.msra.mxu0 0
    %636 = vmatprep.subr.bf16.mxu0 0
    %637 = vmatpush1.bf16.msra.mxu0 0
    %638 = vmatprep.subr.bf16.mxu0 0
    %639 = vmatpush1.bf16.msra.mxu0 0
    %640 = vmatprep.subr.bf16.mxu0 0
    %641 = vmatpush1.bf16.msra.mxu0 0
    %642 = vmatprep.subr.bf16.mxu0 0
    %643 = vmatpush1.bf16.msra.mxu0 0
    %644 = vmatprep.subr.bf16.mxu0 0
    %645 = vmatpush1.bf16.msra.mxu0 0
    %646 = vmatprep.subr.bf16.mxu0 0
    %647 = vmatpush1.bf16.msra.mxu0 0
    %648 = vmatprep.subr.bf16.mxu0 0
    %649 = vmatpush1.bf16.msra.mxu0 0
    %650 = vmatprep.mubr.bf16.mxu0 0
    %651 = vmatmul.mubr.bf16.gmra.mrb[0].mxu0 %v610
    %v652 = vpop.f32.mrb[0].mxu0
    %v653 = vadd.f32 0.0, %v652
    %v654 = vpop.f32.mrb[0].mxu0
    %v655 = vpop.f32.mrb[0].mxu0
    %v656 = vadd.f32 0.0, %v655
    %v657 = vpop.f32.mrb[0].mxu0
    %658 = vmatprep.mubr.bf16.mxu0 0
    %659 = vmatmul.mubr.bf16.gmra.mrb[0].mxu0 %v613
    %v660 = vpop.f32.mrb[0].mxu0
    %v661 = vadd.f32 0.0, %v660
    %v662 = vpop.f32.mrb[0].mxu0
    %v663 = vpop.f32.mrb[0].mxu0
    %v664 = vadd.f32 0.0, %v663
    %v665 = vpop.f32.mrb[0].mxu0
    %666 = vmatprep.mubr.bf16.mxu0 0
    %667 = vmatmul.mubr.bf16.gmra.mrb[0].mxu0 %v616
    %v668 = vpop.f32.mrb[0].mxu0
    %v669 = vadd.f32 0.0, %v668
    %v670 = vpop.f32.mrb[0].mxu0
    %v671 = vpop.f32.mrb[0].mxu0
    %v672 = vadd.f32 0.0, %v671
    %v673 = vpop.f32.mrb[0].mxu0
    %674 = vdwg.mxu0
    %v675 = vpack.c.bf16 %v656, %v653
    %v676 = vpack.c.bf16 %v664, %v661
    %v677 = vpack.c.bf16 %v672, %v669
    %v678 = vld [vmem:[#allocation8] sm:$0xf]
    %v679 = vld [vmem:[#allocation8 + $0x4] sm:$0xf]
    %v680 = vld [vmem:[#allocation8 + $0x8] sm:$0xf]
    %v681 = vld [vmem:[#allocation8 + $0xc] sm:$0xf]
    %v682 = vld [vmem:[#allocation8 + $0x10] sm:$0xf]
    %v683 = vld [vmem:[#allocation8 + $0x14] sm:$0xf]
    %v684 = vld [vmem:[#allocation8 + $0x18] sm:$0xf]
    %v685 = vld [vmem:[#allocation8 + $0x1c] sm:$0xf]
    %v686 = vld [vmem:[#allocation8 + $0x20] sm:$0xf]
    %v687 = vld [vmem:[#allocation8 + $0x24] sm:$0xf]
    %v688 = vld [vmem:[#allocation8 + $0x28] sm:$0xf]
    %v689 = vld [vmem:[#allocation8 + $0x2c] sm:$0xf]
    %v690 = vld [vmem:[#allocation8 + $0x30] sm:$0xf]
    %v691 = vld [vmem:[#allocation8 + $0x34] sm:$0xf]
    %v692 = vld [vmem:[#allocation8 + $0x38] sm:$0xf]
    %v693 = vld [vmem:[#allocation8 + $0x3c] sm:$0xf]
    %v694 = vld [vmem:[#allocation8 + $0x40] sm:$0xf]
    %v695 = vld [vmem:[#allocation8 + $0x44] sm:$0xf]
    %v696 = vld [vmem:[#allocation8 + $0x48] sm:$0xf]
    %v697 = vld [vmem:[#allocation8 + $0x4c] sm:$0xf]
    %v698 = vld [vmem:[#allocation8 + $0x50] sm:$0xf]
    %v699 = vld [vmem:[#allocation8 + $0x54] sm:$0xf]
    %v700 = vld [vmem:[#allocation8 + $0x58] sm:$0xf]
    %v701 = vld [vmem:[#allocation8 + $0x5c] sm:$0xf]
    %v702 = vld [vmem:[#allocation8 + $0x60] sm:$0xf]
    %v703 = vld [vmem:[#allocation8 + $0x64] sm:$0xf]
    %v704 = vld [vmem:[#allocation8 + $0x68] sm:$0xf]
    %v705 = vld [vmem:[#allocation8 + $0x6c] sm:$0xf]
    %v706 = vld [vmem:[#allocation8 + $0x70] sm:$0xf]
    %v707 = vld [vmem:[#allocation8 + $0x74] sm:$0xf]
    %v708 = vld [vmem:[#allocation8 + $0x78] sm:$0xf]
    %v709 = vld [vmem:[#allocation8 + $0x7c] sm:$0xf]
    %v710 = vld [vmem:[%s7] sm:$0x1]
    %v712 = vlaneseq
    %v713 = vshrl.u32 %v712, 7
    %v714 = vsub.s32 0, %v713
    %v715 = vrot.slane %v710, %v714
    %v749 = vunpack.c.l.b16 %v678
    %v750 = vunpack.c.l.b16 %v679
    %v751 = vunpack.c.l.b16 %v680
    %v752 = vunpack.c.l.b16 %v681
    %v753 = vunpack.c.l.b16 %v682
    %v754 = vunpack.c.l.b16 %v683
    %v755 = vunpack.c.l.b16 %v684
    %v756 = vunpack.c.l.b16 %v685
    %v757 = vunpack.c.l.b16 %v686
    %v758 = vunpack.c.l.b16 %v687
    %v759 = vunpack.c.l.b16 %v688
    %v760 = vunpack.c.l.b16 %v689
    %v761 = vunpack.c.l.b16 %v690
    %v762 = vunpack.c.l.b16 %v691
    %v763 = vunpack.c.l.b16 %v692
    %v764 = vunpack.c.l.b16 %v693
    %v765 = vunpack.c.l.b16 %v694
    %v766 = vunpack.c.l.b16 %v695
    %v767 = vunpack.c.l.b16 %v696
    %v768 = vunpack.c.l.b16 %v697
    %v769 = vunpack.c.l.b16 %v698
    %v770 = vunpack.c.l.b16 %v699
    %v771 = vunpack.c.l.b16 %v700
    %v772 = vunpack.c.l.b16 %v701
    %v773 = vunpack.c.l.b16 %v702
    %v774 = vunpack.c.l.b16 %v703
    %v775 = vunpack.c.l.b16 %v704
    %v776 = vunpack.c.l.b16 %v705
    %v777 = vunpack.c.l.b16 %v706
    %v778 = vunpack.c.l.b16 %v707
    %v779 = vunpack.c.l.b16 %v708
    %v780 = vunpack.c.l.b16 %v709
    %v781 = vpack.c.b16 %v750, %v749
    %v782 = vpack.c.b16 %v752, %v751
    %v783 = vpack.c.b16 %v754, %v753
    %v784 = vpack.c.b16 %v756, %v755
    %v785 = vpack.c.b16 %v758, %v757
    %v786 = vpack.c.b16 %v760, %v759
    %v787 = vpack.c.b16 %v762, %v761
    %v788 = vpack.c.b16 %v764, %v763
    %v789 = vpack.c.b16 %v766, %v765
    %v790 = vpack.c.b16 %v768, %v767
    %v791 = vpack.c.b16 %v770, %v769
    %v792 = vpack.c.b16 %v772, %v771
    %v793 = vpack.c.b16 %v774, %v773
    %v794 = vpack.c.b16 %v776, %v775
    %v795 = vpack.c.b16 %v778, %v777
    %v796 = vpack.c.b16 %v780, %v779
    %813 = vmatprep.subr.bf16.mxu0 0
    %814 = vmatpush1.bf16.msra.mxu0 %v781
    %815 = vmatprep.subr.bf16.mxu0 0
    %816 = vmatpush1.bf16.msra.mxu0 %v782
    %817 = vmatprep.subr.bf16.mxu0 0
    %818 = vmatpush1.bf16.msra.mxu0 %v783
    %819 = vmatprep.subr.bf16.mxu0 0
    %820 = vmatpush1.bf16.msra.mxu0 %v784
    %821 = vmatprep.subr.bf16.mxu0 0
    %822 = vmatpush1.bf16.msra.mxu0 %v785
    %823 = vmatprep.subr.bf16.mxu0 0
    %824 = vmatpush1.bf16.msra.mxu0 %v786
    %825 = vmatprep.subr.bf16.mxu0 0
    %826 = vmatpush1.bf16.msra.mxu0 %v787
    %827 = vmatprep.subr.bf16.mxu0 0
    %828 = vmatpush1.bf16.msra.mxu0 %v788
    %829 = vmatprep.subr.bf16.mxu0 0
    %830 = vmatpush1.bf16.msra.mxu0 %v789
    %831 = vmatprep.subr.bf16.mxu0 0
    %832 = vmatpush1.bf16.msra.mxu0 %v790
    %833 = vmatprep.subr.bf16.mxu0 0
    %834 = vmatpush1.bf16.msra.mxu0 %v791
    %835 = vmatprep.subr.bf16.mxu0 0
    %836 = vmatpush1.bf16.msra.mxu0 %v792
    %837 = vmatprep.subr.bf16.mxu0 0
    %838 = vmatpush1.bf16.msra.mxu0 %v793
    %839 = vmatprep.subr.bf16.mxu0 0
    %840 = vmatpush1.bf16.msra.mxu0 %v794
    %841 = vmatprep.subr.bf16.mxu0 0
    %842 = vmatpush1.bf16.msra.mxu0 %v795
    %843 = vmatprep.subr.bf16.mxu0 0
    %844 = vmatpush1.bf16.msra.mxu0 %v796
    %845 = vmatprep.mubr.bf16.mxu0 %v124
    %846 = vmatmul.mubr.bf16.gmra.mrb[0].mxu0 %v675
    %v847 = vpop.f32.mrb[0].mxu0
    %v848 = vadd.f32 %v715, %v847
    %v849 = vpop.f32.mrb[0].mxu0
    %v850 = vpop.f32.mrb[0].mxu0
    %v851 = vadd.f32 %v715, %v850
    %v852 = vpop.f32.mrb[0].mxu0
    %853 = vmatprep.mubr.bf16.mxu0 %v125
    %854 = vmatmul.mubr.bf16.gmra.mrb[0].mxu0 %v676
    %v855 = vpop.f32.mrb[0].mxu0
    %v856 = vadd.f32 %v715, %v855
    %v857 = vpop.f32.mrb[0].mxu0
    %v858 = vpop.f32.mrb[0].mxu0
    %v859 = vadd.f32 %v715, %v858
    %v860 = vpop.f32.mrb[0].mxu0
    %861 = vmatprep.mubr.bf16.mxu0 %v126
    %862 = vmatmul.mubr.bf16.gmra.mrb[0].mxu0 %v677
    %v863 = vpop.f32.mrb[0].mxu0
    %v864 = vadd.f32 %v715, %v863
    %v865 = vpop.f32.mrb[0].mxu0
    %v866 = vpop.f32.mrb[0].mxu0
    %v867 = vadd.f32 %v715, %v866
    %v868 = vpop.f32.mrb[0].mxu0
    %869 = vdwg.mxu0
    %v870 = vmul.f32 %v848, %v105
    %v871 = vmul.f32 %v851, %v105
    %v872 = vmul.f32 %v856, %v105
    %v873 = vmul.f32 %v859, %v105
    %v874 = vmul.f32 %v864, %v105
    %v875 = vmul.f32 %v867, %v105
    %876 = vadd.xlane.f32.xlu0 %v870
    %v877 = vpop.xlane.xlu0 %876
    %878 = vadd.xlane.f32.xlu0 %v871
    %v879 = vpop.xlane.xlu0 %878
    %880 = vadd.xlane.f32.xlu0 %v872
    %v881 = vpop.xlane.xlu0 %880
    %882 = vadd.xlane.f32.xlu0 %v873
    %v883 = vpop.xlane.xlu0 %882
    %884 = vadd.xlane.f32.xlu0 %v874
    %v885 = vpop.xlane.xlu0 %884
    %886 = vadd.xlane.f32.xlu0 %v875
    %v887 = vpop.xlane.xlu0 %886
    %v888 = vmul.f32 %v877, 0.03125
    %v889 = vmul.f32 %v879, 0.03125
    %v890 = vmul.f32 %v881, 0.03125
    %v891 = vmul.f32 %v883, 0.03125
    %v892 = vmul.f32 %v885, 0.03125
    %v893 = vmul.f32 %v887, 0.03125
    %v894 = vsub.f32 %v848, %v888
    %v895 = vsub.f32 %v851, %v889
    %v896 = vsub.f32 %v856, %v890
    %v897 = vsub.f32 %v859, %v891
    %v898 = vsub.f32 %v864, %v892
    %v899 = vsub.f32 %v867, %v893
    %v900 = vmul.f32 %v894, %v105
    %v901 = vmul.f32 %v895, %v105
    %v902 = vmul.f32 %v896, %v105
    %v903 = vmul.f32 %v897, %v105
    %v904 = vmul.f32 %v898, %v105
    %v905 = vmul.f32 %v899, %v105
    %v906 = vmul.f32 %v900, %v900
    %v907 = vmul.f32 %v901, %v901
    %v908 = vmul.f32 %v902, %v902
    %v909 = vmul.f32 %v903, %v903
    %v910 = vmul.f32 %v904, %v904
    %v911 = vmul.f32 %v905, %v905
    %912 = vadd.xlane.f32.xlu0 %v906
    %v913 = vpop.xlane.xlu0 %912
    %914 = vadd.xlane.f32.xlu0 %v907
    %v915 = vpop.xlane.xlu0 %914
    %916 = vadd.xlane.f32.xlu0 %v908
    %v917 = vpop.xlane.xlu0 %916
    %918 = vadd.xlane.f32.xlu0 %v909
    %v919 = vpop.xlane.xlu0 %918
    %920 = vadd.xlane.f32.xlu0 %v910
    %v921 = vpop.xlane.xlu0 %920
    %922 = vadd.xlane.f32.xlu0 %v911
    %v923 = vpop.xlane.xlu0 %922
    %v924 = vmul.f32 %v913, 0.03125
    %v925 = vmul.f32 %v915, 0.03125
    %v926 = vmul.f32 %v917, 0.03125
    %v927 = vmul.f32 %v919, 0.03125
    %v928 = vmul.f32 %v921, 0.03125
    %v929 = vmul.f32 %v923, 0.03125
    %v930 = vadd.f32 %v924, 1e-05
    %v931 = vadd.f32 %v925, 1e-05
    %v932 = vadd.f32 %v926, 1e-05
    %v933 = vadd.f32 %v927, 1e-05
    %v934 = vadd.f32 %v928, 1e-05
    %v935 = vadd.f32 %v929, 1e-05
    %v936 = vrsqrt.pop %v930
    %v937 = vrsqrt.pop %v931
    %v938 = vrsqrt.pop %v932
    %v939 = vrsqrt.pop %v933
    %v940 = vrsqrt.pop %v934
    %v941 = vrsqrt.pop %v935
    %v942 = vmul.f32 %v900, %v936
    %v943 = vmul.f32 %v901, %v937
    %v944 = vmul.f32 %v902, %v938
    %v945 = vmul.f32 %v903, %v939
    %v946 = vmul.f32 %v904, %v940
    %v947 = vmul.f32 %v905, %v941
    %v948 = vld [vmem:[%s9] sm:$0x1]
    %v950 = vlaneseq
    %v951 = vshrl.u32 %v950, 7
    %v952 = vsub.s32 0, %v951
    %v953 = vrot.slane %v948, %v952
    %v955 = vmul.f32 %v942, %v953
    %v956 = vmul.f32 %v943, %v953
    %v957 = vmul.f32 %v944, %v953
    %v958 = vmul.f32 %v945, %v953
    %v959 = vmul.f32 %v946, %v953
    %v960 = vmul.f32 %v947, %v953
    %v961 = vld [vmem:[%s11] sm:$0x1]
    %v963 = vlaneseq
    %v964 = vshrl.u32 %v963, 7
    %v965 = vsub.s32 0, %v964
    %v966 = vrot.slane %v961, %v965
    %v968 = vadd.f32 %v955, %v966
    %v969 = vadd.f32 %v956, %v966
    %v970 = vadd.f32 %v957, %v966
    %v971 = vadd.f32 %v958, %v966
    %v972 = vadd.f32 %v959, %v966
    %v973 = vadd.f32 %v960, %v966
    %v974 = vmax.f32 %v968, 0.0
    %v975 = vmax.f32 %v969, 0.0
    %v976 = vmax.f32 %v970, 0.0
    %v977 = vmax.f32 %v971, 0.0
    %v978 = vmax.f32 %v972, 0.0
    %v979 = vmax.f32 %v973, 0.0
    %980 = vst [vmem:[#allocation11] sm:$0xff] %v974
    %981 = vst [vmem:[#allocation11 + $0x8] sm:$0xff] %v975
    %982 = vst [vmem:[#allocation11 + $0x10] sm:$0xff] %v976
    %983 = vst [vmem:[#allocation11 + $0x18] sm:$0xff] %v977
    %984 = vst [vmem:[#allocation11 + $0x20] sm:$0xff] %v978
    %985 = vst [vmem:[#allocation11 + $0x28] sm:$0xff] %v979
    // Predicated region
    $region66: #{tpu_custom_call.1} parent=1 // pred_check
      _
    $region67: #{tpu_custom_call.1} parent=1 // pred_check_branch
      %987 = sbr.rel (0) target = $region69
    $region68: #{tpu_custom_call.1} parent=1 // pred_region
      %s989 = ssub.s32 1024, 1024
      %990 = vsyncadd [#allocation4], %s989
      %s991 = sshll.u32 [#allocation10], 4
      %s992 = int_to_ptr.vmem [resolvable:$true] %s991
      %997 = dma.vmem_to_hbm [thread:$0]  %s992, 1024, %s12, [#allocation4], 128, 128, 8
    $region69: #{tpu_custom_call.1} parent=1 // pred_fallthru
      _
    // Predicated region
    $region70: #{tpu_custom_call.1} parent=1 // pred_check
      _
    $region71: #{tpu_custom_call.1} parent=1 // pred_check_branch
      %999 = sbr.rel (0) target = $region73
    $region72: #{tpu_custom_call.1} parent=1 // pred_region
      %s1001 = ssub.s32 768, 768
      %1002 = vsyncadd [#allocation12], %s1001
      %s1003 = sshll.u32 [#allocation11], 4
      %s1004 = int_to_ptr.vmem [resolvable:$true] %s1003
      %1009 = dma.vmem_to_hbm [thread:$0]  %s1004, 768, %s13, [#allocation12], 128, 128, 8
    $region73: #{tpu_custom_call.1} parent=1 // pred_fallthru
      _
    // Predicated region
    $region74: #{tpu_custom_call.1} parent=1 // pred_check
      _
    $region75: #{tpu_custom_call.1} parent=1 // pred_check_branch
      %1011 = sbr.rel (0) target = $region77
    $region76: #{tpu_custom_call.1} parent=1 // pred_region
      %1012 = dma.done [#allocation4], 1024
    $region77: #{tpu_custom_call.1} parent=1 // pred_fallthru
      _
    // Predicated region
    $region78: #{tpu_custom_call.1} parent=1 // pred_check
      _
    $region79: #{tpu_custom_call.1} parent=1 // pred_check_branch
      %1014 = sbr.rel (0) target = $region81
    $region80: #{tpu_custom_call.1} parent=1 // pred_region
      %1015 = dma.done [#allocation12], 768
    $region81: #{tpu_custom_call.1} parent=1 // pred_fallthru
      _
    %1016 = vsyncpa [#allocation3], 1
    %1017 = vsyncpa [#allocation6], 1
    %1018 = vsyncpa [#allocation9], 1
    %1019 = vsyncpa [#allocation4], 1
    %1020 = vsyncpa [#allocation12], 1

</llo_original>
